<compile_context>
chip_gen: v7x
topology: tpu7x:2x2x1
jax: 0.10.0
libtpu: 0.0.40
codegen_flags: <defaults>
</compile_context>

<pallas_src>
import functools
import math

import numpy as np
import jax
import jax.numpy as jnp
from jax.experimental import pallas as pl
from jax.experimental.pallas import tpu as pltpu


_FLAT_MATRIX_MAX_BYTES = 2 * 1024 * 1024   # kron matrix kept small (re-read per batch step)
_FLAT_MAX_HWIN_F32 = 512                   # arithmetic-intensity guard (v5e MXU)
_FLAT_MAX_HWIN_BF16 = 1024


# ---------------------------------------------------------------------------
# Generation-aware VMEM budgets
# ---------------------------------------------------------------------------

@functools.lru_cache(maxsize=None)
def _budgets():
    try:
        cap = int(pltpu.get_tpu_info().vmem_capacity_bytes)
    except Exception:
        cap = 64 * 1024 * 1024
    if cap >= 100 * 1024 * 1024:
        # v5e / v6e: 128 MiB physical VMEM -> use most of it.
        return {"vmem_limit": 96 * 1024 * 1024,
                "batch_budget": 28 * 1024 * 1024,
                "slab_budget": 20 * 1024 * 1024}
    # v7x: 64 MiB per TensorCore.
    return {"vmem_limit": 48 * 1024 * 1024,
            "batch_budget": 10 * 1024 * 1024,
            "slab_budget": 8 * 1024 * 1024}


# ---------------------------------------------------------------------------
# Kernels (all casts happen here, not in the wrapper)
# ---------------------------------------------------------------------------

def _flat_kernel(x_ref, m_ref, o_ref):
    """out[b, :] = x[b, :] @ M for a (B, hw_in) x (hw_in, t_hw) block."""
    x = x_ref[...].astype(m_ref.dtype)
    o_ref[...] = jnp.dot(x, m_ref[...],
                         preferred_element_type=jnp.float32).astype(o_ref.dtype)


def _slab_concat_kernel(x_ref, r_ref, o_ref):
    """Integer height scale, lane-widened store.

    The output is the real (nc, h_out, w_out) array viewed (pure metadata) as
    (nc, h_in, kh*w_out): row r of the view is kh identical, lane-concatenated
    copies of the width-upsampled input row r -> wide unmasked stores."""
    b, h_in, w_in = x_ref.shape
    w_out = r_ref.shape[1]
    kh = o_ref.shape[2] // w_out
    x2 = x_ref[...].astype(r_ref.dtype).reshape(b * h_in, w_in)
    xw = jnp.dot(x2, r_ref[...], preferred_element_type=jnp.float32)
    xw = xw.reshape(b, h_in, w_out).astype(o_ref.dtype)
    o_ref[...] = jnp.concatenate([xw] * kh, axis=-1) if kh > 1 else xw


def _slab_repeat_kernel(x_ref, r_ref, o_ref):
    """Very large maps, integer height scale, W_out tiled: width replication via
    one batched MXU matmul + sublane repeat for the height."""
    b, h_in, w_in = x_ref.shape
    _, h_out, tw = o_ref.shape
    kh = h_out // h_in
    x2 = x_ref[...].astype(r_ref.dtype).reshape(b * h_in, w_in)
    xw = jnp.dot(x2, r_ref[...], preferred_element_type=jnp.float32)
    xw = xw.reshape(b, h_in, tw).astype(o_ref.dtype)
    o_ref[...] = jnp.repeat(xw, kh, axis=1) if kh > 1 else xw


def _slab_einsum_kernel(x_ref, r_ref, l_ref, o_ref):
    """Non-integer height ratio: width matmul + ONE batched 0/1 contraction
    over H (no Python per-slab unroll, no b cap).  Intermediates stay f32,
    single final cast at the store."""
    b, h_in, w_in = x_ref.shape
    _, h_out, tw = o_ref.shape
    x2 = x_ref[...].astype(r_ref.dtype).reshape(b * h_in, w_in)
    xw = jnp.dot(x2, r_ref[...], preferred_element_type=jnp.float32)
    xw = xw.reshape(b, h_in, tw)
    lb = jnp.broadcast_to(l_ref[...], (b, h_out, h_in))          # 0/1 matrix, f32
    out = jnp.einsum("boh,bht->bot", lb, xw,
                     preferred_element_type=jnp.float32)
    o_ref[...] = out.astype(o_ref.dtype)


# ---------------------------------------------------------------------------
# Host-side helpers (all static / compile-time)
# ---------------------------------------------------------------------------

def _replication_matrix(in_size, out_size):
    """R[i_in, i_out] = 1 iff floor(i_out * in_size / out_size) == i_in."""
    src = (np.arange(out_size) * in_size) // out_size
    return src[None, :] == np.arange(in_size)[:, None]


def _choose_batch(n_slabs, per_slab_bytes, budget, *, align=1, min_steps=4):
    """Slabs per grid step: fill the VMEM budget but keep >= min_steps grid
    steps (pipelining / v7x 2-TC) and keep sublane alignment in the flat path."""
    b = max(1, int(budget // max(per_slab_bytes, 1)))
    if n_slabs > 1 and min_steps > 1:
        b = min(b, max(1, pl.cdiv(n_slabs, min_steps)))
    b = min(b, n_slabs)
    if align > 1 and b < n_slabs:
        if b >= align:
            b = (b // align) * align
        else:
            b = min(align, n_slabs)
    return max(1, min(b, n_slabs))


def _choose_flat_hw_tile(hw_out, batch_steps):
    """If the batch axis collapsed to a single step, split hw_out into >= 2
    lane-aligned (multiple-of-128) tiles so both v7x TCs get work and the
    pipeline has iterations."""
    if batch_steps > 1 or hw_out < 256:
        return hw_out
    t = ((hw_out // 4) // 128) * 128
    return min(hw_out, max(128, t))


def _choose_w_tile(h_in, h_out, w_out, in_isz, out_isz, c_isz, budget):
    """Tile W_out (multiples of 128) so the per-slab footprint is bounded."""
    per_col = h_out * (2 * out_isz + 4 + c_isz) + h_in * (4 + c_isz)
    tw = int(budget // max(per_col, 1))
    if tw >= w_out:
        return w_out
    return min(w_out, max(128, (tw // 128) * 128))


# ---------------------------------------------------------------------------
# Core implementation (2-D nearest upsample, NCHW)
# ---------------------------------------------------------------------------

@functools.partial(jax.jit, static_argnames=("h_out", "w_out"))
def _nearest_upsample_2d(x, h_out, w_out):
    n, c, h_in, w_in = x.shape
    in_dtype = x.dtype
    in_isz = np.dtype(in_dtype).itemsize
    out_isz = in_isz

    if in_dtype in (jnp.float32, jnp.bfloat16):
        cdtype = in_dtype          # native MXU dtype, still bit-exact (x * 1.0)
    else:
        # TODO(synk): integer label maps with values >= 2**24 lose exactness
        #             through the f32 MXU path; a gather kernel would fix it.
        cdtype = jnp.float32
    c_isz = np.dtype(cdtype).itemsize

    bud = _budgets()
    nc = n * c
    hw_in, hw_out = h_in * w_in, h_out * w_out
    integer_kh = (h_out % h_in == 0) and (h_out >= h_in)
    kh = (h_out // h_in) if integer_kh else 0

    cparams2 = pltpu.CompilerParams(
        dimension_semantics=("parallel", "parallel"),
        vmem_limit_bytes=bud["vmem_limit"])
    cparams1 = pltpu.CompilerParams(
        dimension_semantics=("parallel",),
        vmem_limit_bytes=bud["vmem_limit"])

    # ----------------------- path selection --------------------------------
    m_bytes = hw_in * hw_out * c_isz
    flat_feasible = m_bytes <= _FLAT_MATRIX_MAX_BYTES
    max_hw_in = _FLAT_MAX_HWIN_BF16 if cdtype == jnp.bfloat16 else _FLAT_MAX_HWIN_F32
    slab_lane_dense = (w_out % 128 == 0) or (integer_kh and (kh * w_out) % 128 == 0)
    use_flat = flat_feasible and (hw_in <= max_hw_in or not slab_lane_dense)

    # ----------------------- flat path (small maps) ------------------------
    if use_flat:
        m = jnp.asarray(np.kron(_replication_matrix(h_in, h_out),
                                _replication_matrix(w_in, w_out)), dtype=cdtype)
        x2 = x.reshape(nc, hw_in)
        per_slab = (2 * hw_in * in_isz + 2 * hw_out * out_isz
                    + hw_in * c_isz + hw_out * 4)
        avail = max(bud["batch_budget"] - 2 * m_bytes, per_slab)
        align = 16 if cdtype == jnp.bfloat16 else 8
        b = _choose_batch(nc, per_slab, avail, align=align, min_steps=4)
        nb_i = pl.cdiv(nc, b)
        t_hw = _choose_flat_hw_tile(hw_out, nb_i)
        nb_j = pl.cdiv(hw_out, t_hw)

        out2 = pl.pallas_call(
            _flat_kernel,
            out_shape=jax.ShapeDtypeStruct((nc, hw_out), in_dtype),
            grid_spec=pltpu.PrefetchScalarGridSpec(
                num_scalar_prefetch=0,
                grid=(nb_i, nb_j),
                in_specs=[pl.BlockSpec((b, hw_in), lambda i, j: (i, 0)),
                          pl.BlockSpec((hw_in, t_hw), lambda i, j: (0, j))],
                out_specs=pl.BlockSpec((b, t_hw), lambda i, j: (i, j))),
            compiler_params=cparams2,
        )(x2, m)
        return out2.reshape(n, c, h_out, w_out)

    # ----------------------- slab paths (larger maps) ----------------------
    x3 = x.reshape(nc, h_in, w_in)
    r = jnp.asarray(_replication_matrix(w_in, w_out), dtype=cdtype)   # (W_in, W_out)

    if integer_kh:
        # (a) lane-widened concat store: output viewed as (nc, h_in, kh*w_out),
        #     which is byte-identical to (nc, h_out, w_out) in row-major order.
        concat_per_slab = (2 * hw_in * in_isz + 2 * h_in * kh * w_out * out_isz
                           + hw_in * c_isz + h_in * w_out * 4
                           + h_in * kh * w_out * c_isz)
        if concat_per_slab <= bud["slab_budget"]:
            b = _choose_batch(nc, concat_per_slab, bud["batch_budget"],
                              align=1, min_steps=4)
            out3 = pl.pallas_call(
                _slab_concat_kernel,
                out_shape=jax.ShapeDtypeStruct((nc, h_in, kh * w_out), in_dtype),
                grid_spec=pltpu.PrefetchScalarGridSpec(
                    num_scalar_prefetch=0,
                    grid=(pl.cdiv(nc, b),),
                    in_specs=[pl.BlockSpec((b, h_in, w_in), lambda i: (i, 0, 0)),
                              pl.BlockSpec((w_in, w_out), lambda i: (0, 0))],
                    out_specs=pl.BlockSpec((b, h_in, kh * w_out),
                                           lambda i: (i, 0, 0))),
                compiler_params=cparams1,
            )(x3, r)
            return out3.reshape(n, c, h_out, w_out)    # pure metadata reshape

        # (b) very large maps: tile W_out (multiples of 128), sublane repeat.
        tw = _choose_w_tile(h_in, h_out, w_out, in_isz, out_isz, c_isz,
                            bud["slab_budget"])
        per_slab = (2 * hw_in * in_isz + 2 * h_out * tw * out_isz
                    + hw_in * c_isz + h_in * tw * 4 + h_out * tw * c_isz)
        b = _choose_batch(nc, per_slab, bud["batch_budget"], align=1, min_steps=4)
        out3 = pl.pallas_call(
            _slab_repeat_kernel,
            out_shape=jax.ShapeDtypeStruct((nc, h_out, w_out), in_dtype),
            grid_spec=pltpu.PrefetchScalarGridSpec(
                num_scalar_prefetch=0,
                grid=(pl.cdiv(nc, b), pl.cdiv(w_out, tw)),
                in_specs=[pl.BlockSpec((b, h_in, w_in), lambda i, j: (i, 0, 0)),
                          pl.BlockSpec((w_in, tw), lambda i, j: (0, j))],
                out_specs=pl.BlockSpec((b, h_out, tw), lambda i, j: (i, 0, j))),
            compiler_params=cparams2,
        )(x3, r)
        return out3.reshape(n, c, h_out, w_out)

    # (c) non-integer height ratio: batched 0/1 contraction over H.
    l = jnp.asarray(_replication_matrix(h_in, h_out).T, dtype=jnp.float32)  # (H_out, H_in)
    tw = _choose_w_tile(h_in, h_out, w_out, in_isz, out_isz, c_isz,
                        bud["slab_budget"])
    per_slab = (2 * hw_in * in_isz + 2 * h_out * tw * out_isz
                + hw_in * c_isz + h_in * tw * 4
                + h_out * h_in * 4 + h_out * tw * 4)
    b = _choose_batch(nc, per_slab, bud["batch_budget"], align=1, min_steps=4)
    out3 = pl.pallas_call(
        _slab_einsum_kernel,
        out_shape=jax.ShapeDtypeStruct((nc, h_out, w_out), in_dtype),
        grid_spec=pltpu.PrefetchScalarGridSpec(
            num_scalar_prefetch=0,
            grid=(pl.cdiv(nc, b), pl.cdiv(w_out, tw)),
            in_specs=[pl.BlockSpec((b, h_in, w_in), lambda i, j: (i, 0, 0)),
                      pl.BlockSpec((w_in, tw), lambda i, j: (0, j)),
                      pl.BlockSpec((h_out, h_in), lambda i, j: (0, 0))],
            out_specs=pl.BlockSpec((b, h_out, tw), lambda i, j: (i, 0, j))),
        compiler_params=cparams2,
    )(x3, r, l)
    return out3.reshape(n, c, h_out, w_out)


# ---------------------------------------------------------------------------
# Public wrapper (equivalent of Upsample.forward)
# ---------------------------------------------------------------------------

def upsample(x, size=None, scale_factor=None, mode="nearest", align_corners=False):
    """nnUNet Upsample.forward for 4-D NCHW inputs, mode='nearest'."""
    if mode != "nearest":
        # TODO(synk): bilinear / trilinear interpolation not implemented.
        raise NotImplementedError("only mode='nearest' is implemented")
    if x.ndim != 4:
        # TODO(synk): 5-D NCDHW (3-D nearest) inputs not implemented.
        raise NotImplementedError("only 4-D NCHW inputs are implemented")
    del align_corners                       # PyTorch ignores it for 'nearest'
    if size is None and scale_factor is None:
        raise ValueError("either size or scale_factor must be given")

    _, _, h_in, w_in = x.shape
    if size is not None:
        if isinstance(size, (int, float)):
            h_out, w_out = int(size), int(size)
        else:
            h_out, w_out = int(size[0]), int(size[1])
    else:
        if isinstance(scale_factor, (int, float)):
            sh = sw = float(scale_factor)
        else:
            sh, sw = float(scale_factor[0]), float(scale_factor[1])
        # TODO(synk): with a non-integer scale_factor PyTorch (default
        # recompute_scale_factor) derives indices from the scale itself, which
        # can differ by one pixel; exact match is guaranteed for explicit
        # `size=` and for integer scale factors (nnUNet's usage).
        h_out = int(math.floor(h_in * sh))
        w_out = int(math.floor(w_in * sw))
    return _nearest_upsample_2d(x, h_out=h_out, w_out=w_out)


class Upsample:
    """Drop-in functional mirror of the PyTorch module."""

    def __init__(self, size=None, scale_factor=None, mode="nearest",
                 align_corners=False):
        self.size = size
        self.scale_factor = scale_factor
        self.mode = mode
        self.align_corners = align_corners

    def __call__(self, x):
        return upsample(x, size=self.size, scale_factor=self.scale_factor,
                        mode=self.mode, align_corners=self.align_corners)


# ---------------------------------------------------------------------------
# Reference + demo
# ---------------------------------------------------------------------------

def _reference_nearest(x, h_out, w_out):
    _, _, h_in, w_in = x.shape
    idx_h = (jnp.arange(h_out) * h_in) // h_out
    idx_w = (jnp.arange(w_out) * w_in) // w_out
    return x[:, :, idx_h, :][:, :, :, idx_w]


if __name__ == "__main__":
    key = jax.random.PRNGKey(0)
    kf, ki = jax.random.split(key)

    # 1) nnUNet's common usage: Upsample(scale_factor=2, mode='nearest'), f32.
    x = jax.random.normal(kf, (2, 4, 16, 16), dtype=jnp.float32)
    up2 = Upsample(scale_factor=2, mode="nearest")
    y = jax.block_until_ready(up2(x))
    assert y.shape == (2, 4, 32, 32) and y.dtype == x.dtype
    assert jnp.array_equal(y, _reference_nearest(x, 32, 32)), "f32 scale=2 mismatch"

    # 2) explicit size with non-integer ratios (flat path, tiled hw_out).
    y2 = jax.block_until_ready(upsample(x, size=(24, 20)))
    assert y2.shape == (2, 4, 24, 20)
    assert jnp.array_equal(y2, _reference_nearest(x, 24, 20)), "size=(24,20) mismatch"

    # 3) bfloat16 stays in bfloat16 end to end (bit-exact replication).
    xb = x.astype(jnp.bfloat16)
    y3 = jax.block_until_ready(up2(xb))
    assert y3.dtype == jnp.bfloat16
    assert jnp.array_equal(y3, _reference_nearest(xb, 32, 32)), "bf16 mismatch"

    # 4) integer label map: cast happens inside the kernel, output stays int32.
    xi = jax.random.randint(ki, (2, 4, 16, 16), 0, 255, dtype=jnp.int32)
    y4 = jax.block_until_ready(up2(xi))
    assert y4.dtype == jnp.int32
    assert jnp.array_equal(y4, _reference_nearest(xi, 32, 32)), "int32 mismatch"

    # 5) larger map -> slab path, integer scale, lane-widened concat store.
    xl = jax.random.normal(kf, (2, 4, 96, 96), dtype=jnp.float32)
    y5 = jax.block_until_ready(upsample(xl, scale_factor=2))
    assert y5.shape == (2, 4, 192, 192)
    assert jnp.array_equal(y5, _reference_nearest(xl, 192, 192)), "slab concat mismatch"

    # 6) larger map, non-integer height ratio -> batched-einsum slab path.
    xn = jax.random.normal(ki, (1, 2, 48, 64), dtype=jnp.float32)
    y6 = jax.block_until_ready(upsample(xn, size=(120, 256)))
    assert y6.shape == (1, 2, 120, 256)
    assert jnp.array_equal(y6, _reference_nearest(xn, 120, 256)), "slab einsum mismatch"

    print("KERNEL_OK")
</pallas_src>

<mosaic_0001>
module attributes {stable_mosaic.version = 11 : i64} {
  func.func @_flat_kernel(%arg0: i32, %arg1: i32, %arg2: memref<8x256xf32, #tpu.memory_space<vmem>>, %arg3: memref<256x256xf32, #tpu.memory_space<vmem>>, %arg4: memref<8x256xf32, #tpu.memory_space<vmem>>) attributes {dimension_semantics = [#tpu.dimension_semantics<parallel>, #tpu.dimension_semantics<parallel>], iteration_bounds = array<i64: 1, 4>, scalar_prefetch = 0 : i64, scratch_operands = 0 : i64, tpu.core_type = #tpu.core_type<tc>, window_params = [{transform_indices = @transform_0, window_bounds = array<i64: 8, 256>}, {transform_indices = @transform_1, window_bounds = array<i64: 256, 256>}, {transform_indices = @transform_2, window_bounds = array<i64: 8, 256>}]} {
    %c0 = arith.constant 0 : index
    %c0_0 = arith.constant 0 : index
    %0 = vector.load %arg2[%c0, %c0_0] : memref<8x256xf32, #tpu.memory_space<vmem>>, vector<8x256xf32>
    %c0_1 = arith.constant 0 : index
    %c0_2 = arith.constant 0 : index
    %1 = vector.load %arg3[%c0_1, %c0_2] : memref<256x256xf32, #tpu.memory_space<vmem>>, vector<256x256xf32>
    %cst = arith.constant dense<0.000000e+00> : vector<8x256xf32>
    %2 = tpu.matmul %0, %1, %cst {dimension_numbers = #tpu.dot_dimension_numbers<[1], [0], [0], [1], [0, 0, 1, 1], [], []>} : vector<8x256xf32>, vector<256x256xf32>, vector<8x256xf32> -> vector<8x256xf32>
    %c0_3 = arith.constant 0 : index
    %c0_4 = arith.constant 0 : index
    %3 = vector.load %arg4[%c0_3, %c0_4] : memref<8x256xf32, #tpu.memory_space<vmem>>, vector<8x256xf32>
    tpu.vector_store %arg4[%c0_3, %c0_4], %2 {strides = array<i32>} : memref<8x256xf32, #tpu.memory_space<vmem>>, vector<8x256xf32>,
    return
  }
  func.func @transform_0(%arg0: i32, %arg1: i32) -> (i32, i32) {
    %c0_i32 = arith.constant 0 : i32
    %c0_i32_0 = arith.constant 0 : i32
    return %arg0, %c0_i32 : i32, i32
  }
  func.func @transform_1(%arg0: i32, %arg1: i32) -> (i32, i32) {
    %c0_i32 = arith.constant 0 : i32
    %c0_i32_0 = arith.constant 0 : i32
    return %c0_i32, %arg1 : i32, i32
  }
  func.func @transform_2(%arg0: i32, %arg1: i32) -> (i32, i32) {
    %c0_i32 = arith.constant 0 : i32
    return %arg0, %arg1 : i32, i32
  }
}

</mosaic_0001>

<llo_original>
// kernel: _nearest_upsample_2d.1
$region0: #{_nearest_upsample_2d.1}
  #allocation0 [shape = 'u32[]', space=smem, size = 0x4, offset = 0x4, fixed_abs, tag = 'smem constant byte address 0x4 - core index']
  #allocation1 [shape = 'u32[144,128]{1,0:T(1,128)}', space=vmem, size = 0x12000, scoped, tag = 'internal scratch']
  %s0 = inlined_call_operand.vmem [shape: f32[8,256], index: 0, kind: input, shape index: {}]
  %s1 = inlined_call_operand.hbm [shape: f32[256,1024], index: 1, kind: input, shape index: {}]
  %s2 = inlined_call_operand.vmem [shape: f32[8,1024], index: 2, kind: output, shape index: {}]
  %s3 = sld [smem:[#allocation0]]
  $region45: #{_nearest_upsample_2d.1} parent=0
    _
  %s5 = ssub.s32 1, %s3
  %s6 = scalar_select 0, %s5, %s3
  $region1: #{_nearest_upsample_2d.1} parent=0
    #allocation2 [shape = 'u8[524288]{0}', space=vmem, size = 0x80000, scoped, tag = 'input window, operand 1']
    #allocation3 [shape = 's32[2]{0}', space=sflag, size = 0x8, scoped, tag = 'scoped memory for _nearest_upsample_2d.1']
    %7 = vsyncpa [#allocation3], 0
    %s8 = scalar_lea.sflag [#allocation3], 1
    %9 = vsyncpa %s8, 0
    loop: start=0, step=1, limit=6
    $region2: #{_nearest_upsample_2d.1} parent=1 // loop_pre_header
      _
    $region3: #{_nearest_upsample_2d.1} parent=1 // loop_header
      %s11 = sphi 0, %s15
      %p12 = scmp.ge.s32.totalorder %s11, 6
      %s18 = sphi 0, %s30
      %s19 = sphi 0, %s26
      %s20 = sphi 0, %s18
      %s21 = sphi 0, %s19
      %s22 = sphi 0, %s20
      %s23 = sphi 0, %s21
      %s33 = sphi 0, %s35
      %s36 = sphi 0, %s33
      %s37 = sphi 0, %s36
      %s53 = sphi 0, %s37
      %s59 = sphi 0, %s61
      %s62 = sphi 0, %s59
      %s63 = sphi 0, %s62
      %s79 = sphi 0, %s63
      %s87 = sphi 0, %s89
      %s90 = sphi 0, %s87
      %s91 = sphi 0, %s90
      %s107 = sphi 0, %s91
    $region4: #{_nearest_upsample_2d.1} parent=1 // loop_header_branch
      %14 = sbr.rel (%p12) target = $region8
    $region5: #{_nearest_upsample_2d.1} parent=1 // loop_body
      %s16 = ssub.s32 %s11, 1
      %s17 = ssub.s32 %s11, 2
      %s24 = sadd.s32 1, %s19
      %p25 = scmp.ge.s32.totalorder %s24, 4
      %s26 = scalar_select %p25, 0, %s24
      %s27 = sadd.s32 1, %s18
      %s28 = scalar_select %p25, %s27, %s18
      %p29 = scmp.ge.s32.totalorder %s28, 1
      %s30 = scalar_select %p29, 0, %s28
      %s31 = ssub.s32 %s18, %s30
      %p32 = scmp.eq.s32.totalorder %s31, 0
      %s34 = sadd.s32 %s33, 1
      %s35 = scalar_select %p32, %s33, %s34
      %p38 = pneg %p32
      %p39 = scmp.eq.s32.totalorder %s11, 3
      %p40 = por %p38, %p39
      %p41 = scmp.ne.s32.totalorder %s33, %s36
      %p42 = scmp.eq.s32.totalorder %s11, 0
      %p43 = por %p41, %p42
      %p44 = scmp.ne.s32.totalorder %s33, %s36
      %p45 = scmp.eq.s32.totalorder %s16, 3
      %p46 = por %p44, %p45
      %p47 = scmp.ne.s32.totalorder %s36, %s37
      %p48 = scmp.eq.s32.totalorder %s16, 0
      %p49 = por %p47, %p48
      %p50 = scmp.ne.s32.totalorder %s36, %s37
      %p51 = scmp.eq.s32.totalorder %s17, 3
      %p52 = por %p50, %p51
      %p54 = scmp.ne.s32.totalorder %s37, %s53
      %p55 = scmp.eq.s32.totalorder %s17, 0
      %p56 = por %p54, %p55
      %s57 = ssub.s32 %s19, %s26
      %p58 = scmp.eq.s32.totalorder %s57, 0
      %s60 = sadd.s32 %s59, 1
      %s61 = scalar_select %p58, %s59, %s60
      %p64 = pneg %p58
      %p65 = scmp.eq.s32.totalorder %s11, 3
      %p66 = por %p64, %p65
      %p67 = scmp.ne.s32.totalorder %s59, %s62
      %p68 = scmp.eq.s32.totalorder %s11, 0
      %p69 = por %p67, %p68
      %p70 = scmp.ne.s32.totalorder %s59, %s62
      %p71 = scmp.eq.s32.totalorder %s16, 3
      %p72 = por %p70, %p71
      %p73 = scmp.ne.s32.totalorder %s62, %s63
      %p74 = scmp.eq.s32.totalorder %s16, 0
      %p75 = por %p73, %p74
      %p76 = scmp.ne.s32.totalorder %s62, %s63
      %p77 = scmp.eq.s32.totalorder %s17, 3
      %p78 = por %p76, %p77
      %p80 = scmp.ne.s32.totalorder %s63, %s79
      %p81 = scmp.eq.s32.totalorder %s17, 0
      %p82 = por %p80, %p81
      %s83 = ssub.s32 %s18, %s30
      %s84 = ssub.s32 %s19, %s26
      %s85 = sor.u32 %s83, %s84
      %p86 = scmp.eq.s32.totalorder %s85, 0
      %s88 = sadd.s32 %s87, 1
      %s89 = scalar_select %p86, %s87, %s88
      %p92 = pneg %p86
      %p93 = scmp.eq.s32.totalorder %s11, 3
      %p94 = por %p92, %p93
      %p95 = scmp.ne.s32.totalorder %s87, %s90
      %p96 = scmp.eq.s32.totalorder %s11, 0
      %p97 = por %p95, %p96
      %p98 = scmp.ne.s32.totalorder %s87, %s90
      %p99 = scmp.eq.s32.totalorder %s16, 3
      %p100 = por %p98, %p99
      %p101 = scmp.ne.s32.totalorder %s90, %s91
      %p102 = scmp.eq.s32.totalorder %s16, 0
      %p103 = por %p101, %p102
      %p104 = scmp.ne.s32.totalorder %s90, %s91
      %p105 = scmp.eq.s32.totalorder %s17, 3
      %p106 = por %p104, %p105
      %p108 = scmp.ne.s32.totalorder %s91, %s107
      %p109 = scmp.eq.s32.totalorder %s17, 0
      %p110 = por %p108, %p109
      %p111 = scmp.le.s32.totalorder 1, %s11
      %p112 = scmp.lt.s32.totalorder %s11, 5
      %p113 = pnand %p111, %p112
      %p114 = pneg %p113
      // Predicated region
      $region9: #{_nearest_upsample_2d.1} parent=5 // pred_check
        _
      $region10: #{_nearest_upsample_2d.1} parent=5 // pred_check_branch
        %116 = sbr.rel (%p113) target = $region12
      $region11: #{_nearest_upsample_2d.1} parent=5 // pred_region
        %s117 = ssub.s32 %s11, 1
        // Predicated region
        $region13: #{_nearest_upsample_2d.1} parent=11 // pred_check
          %p118 = pneg %p49
        $region14: #{_nearest_upsample_2d.1} parent=11 // pred_check_branch
          %120 = sbr.rel (%p118) target = $region16
        $region15: #{_nearest_upsample_2d.1} parent=11 // pred_region
          %p121 = scmp.lt.s32.totalorder %s20, 0
          %s122 = scalar_select %p121, %s20, 0
          %s123 = smul.addr %s122, 2
          %s124 = smul.addr %s123, 8
          %s125 = scalar_lea.vmem %s0, %s124
        $region16: #{_nearest_upsample_2d.1} parent=11 // pred_fallthru
          _
      $region12: #{_nearest_upsample_2d.1} parent=5 // pred_fallthru
        _
      %p126 = scmp.lt.s32.totalorder %s11, 4
      // Predicated region
      $region17: #{_nearest_upsample_2d.1} parent=5 // pred_check
        %p127 = pneg %p126
      $region18: #{_nearest_upsample_2d.1} parent=5 // pred_check_branch
        %129 = sbr.rel (%p127) target = $region20
      $region19: #{_nearest_upsample_2d.1} parent=5 // pred_region
        // Predicated region
        $region21: #{_nearest_upsample_2d.1} parent=19 // pred_check
          %p130 = pneg %p69
        $region22: #{_nearest_upsample_2d.1} parent=19 // pred_check_branch
          %132 = sbr.rel (%p130) target = $region24
        $region23: #{_nearest_upsample_2d.1} parent=19 // pred_region
          %s133 = sand.u32 %s59, 1
          %s134 = scalar_lea.sflag [#allocation3], %s133
          %s135 = sand.u32 %s59, 1
          %s136 = smul.addr %s135, 512
          %s137 = scalar_lea.vmem [#allocation2], %s136
          %s138 = smul.u32 2, %s19
          %s140 = ssub.s32 8192, 8192
          %141 = vsyncadd %s134, %s140
          %s142 = smul.addr %s138, 128
          %s143 = scalar_lea.hbm %s1, %s142
          %s144 = sshll.u32 %s137, 4
          %s145 = int_to_ptr.vmem [resolvable:$true] %s144
          %150 = dma.hbm_to_vmem [thread:$0]  %s143, 8192, %s145, %s134, 1024, 256, 16
        $region24: #{_nearest_upsample_2d.1} parent=19 // pred_fallthru
          _
      $region20: #{_nearest_upsample_2d.1} parent=5 // pred_fallthru
        _
      %p151 = scmp.le.s32.totalorder 1, %s11
      %p152 = scmp.lt.s32.totalorder %s11, 5
      %p153 = pnand %p151, %p152
      %p154 = pneg %p153
      // Predicated region
      $region25: #{_nearest_upsample_2d.1} parent=5 // pred_check
        _
      $region26: #{_nearest_upsample_2d.1} parent=5 // pred_check_branch
        %156 = sbr.rel (%p153) target = $region28
      $region27: #{_nearest_upsample_2d.1} parent=5 // pred_region
        %s157 = ssub.s32 %s11, 1
        %s158 = sand.u32 %s62, 1
        %s159 = scalar_lea.sflag [#allocation3], %s158
        %s160 = sand.u32 %s62, 1
        %s161 = smul.addr %s160, 512
        %s162 = scalar_lea.vmem [#allocation2], %s161
        // Predicated region
        $region29: #{_nearest_upsample_2d.1} parent=27 // pred_check
          %p163 = pneg %p75
        $region30: #{_nearest_upsample_2d.1} parent=27 // pred_check_branch
          %165 = sbr.rel (%p163) target = $region32
        $region31: #{_nearest_upsample_2d.1} parent=27 // pred_region
          %166 = dma.done %s159, 8192
        $region32: #{_nearest_upsample_2d.1} parent=27 // pred_fallthru
          _
        %p167 = scmp.lt.s32.totalorder %s20, 0
        %s168 = scalar_select %p167, %s20, 0
        %s169 = smul.addr %s168, 2
        %s170 = smul.addr %s169, 8
        %s171 = scalar_lea.vmem %s0, %s170
        %p172 = pneg %p49
        %p173 = pneg %p46
        %s174 = sand.u32 %s62, 1
        %s175 = scalar_lea.sflag [#allocation3], %s174
        %s176 = sand.u32 %s62, 1
        %s177 = smul.addr %s176, 512
        %s178 = scalar_lea.vmem [#allocation2], %s177
        %p179 = pneg %p75
        %p180 = pneg %p72
        %p181 = pneg %p103
        %p182 = pneg %p100
        %s183 = smul.u32 2, %s21
        %p184 = scmp.lt.s32.totalorder %s20, 0
        %s185 = scalar_select %p184, %s20, 0
        %p186 = scmp.lt.s32.totalorder %s183, 7
        %s187 = scalar_select %p186, %s183, 7
        %s188 = smul.addr %s185, 8
        %s189 = sadd.s32 %s187, %s188
        %s190 = smul.addr %s189, 8
        %s191 = scalar_lea.vmem %s2, %s190
        %p192 = scmp.lt.s32.totalorder %s20, 0
        %s193 = scalar_select %p192, %s20, 0
        %s194 = smul.addr %s193, 2
        %s195 = smul.addr %s194, 8
        %s196 = scalar_lea.vmem %s0, %s195
        %s197 = smul.u32 2, %s21
        %s198 = smul.u32 2, %s21
        %p199 = scmp.lt.s32.totalorder %s20, 0
        %s200 = scalar_select %p199, %s20, 0
        %p201 = scmp.lt.s32.totalorder %s198, 7
        %s202 = scalar_select %p201, %s198, 7
        %s203 = smul.addr %s200, 8
        %s204 = sadd.s32 %s202, %s203
        %s205 = smul.addr %s204, 8
        %s206 = scalar_lea.vmem %s2, %s205
        %s207 = smul.u32 2, %s21
        %v208 = vld [vmem:[%s196] sm:$0xff]
        %v209 = vld [vmem:[%s196 + $0x8] sm:$0xff]
        %v210 = vld [vmem:[%s162] sm:$0xff]
        %v211 = vld [vmem:[%s162 + $0x8] sm:$0xff]
        %v212 = vld [vmem:[%s162 + $0x10] sm:$0xff]
        %v213 = vld [vmem:[%s162 + $0x18] sm:$0xff]
        %v214 = vld [vmem:[%s162 + $0x20] sm:$0xff]
        %v215 = vld [vmem:[%s162 + $0x28] sm:$0xff]
        %v216 = vld [vmem:[%s162 + $0x30] sm:$0xff]
        %v217 = vld [vmem:[%s162 + $0x38] sm:$0xff]
        %v218 = vld [vmem:[%s162 + $0x40] sm:$0xff]
        %v219 = vld [vmem:[%s162 + $0x48] sm:$0xff]
        %v220 = vld [vmem:[%s162 + $0x50] sm:$0xff]
        %v221 = vld [vmem:[%s162 + $0x58] sm:$0xff]
        %v222 = vld [vmem:[%s162 + $0x60] sm:$0xff]
        %v223 = vld [vmem:[%s162 + $0x68] sm:$0xff]
        %v224 = vld [vmem:[%s162 + $0x70] sm:$0xff]
        %v225 = vld [vmem:[%s162 + $0x78] sm:$0xff]
        %v226 = vld [vmem:[%s162 + $0x80] sm:$0xff]
        %v227 = vld [vmem:[%s162 + $0x88] sm:$0xff]
        %v228 = vld [vmem:[%s162 + $0x90] sm:$0xff]
        %v229 = vld [vmem:[%s162 + $0x98] sm:$0xff]
        %v230 = vld [vmem:[%s162 + $0xa0] sm:$0xff]
        %v231 = vld [vmem:[%s162 + $0xa8] sm:$0xff]
        %v232 = vld [vmem:[%s162 + $0xb0] sm:$0xff]
        %v233 = vld [vmem:[%s162 + $0xb8] sm:$0xff]
        %v234 = vld [vmem:[%s162 + $0xc0] sm:$0xff]
        %v235 = vld [vmem:[%s162 + $0xc8] sm:$0xff]
        %v236 = vld [vmem:[%s162 + $0xd0] sm:$0xff]
        %v237 = vld [vmem:[%s162 + $0xd8] sm:$0xff]
        %v238 = vld [vmem:[%s162 + $0xe0] sm:$0xff]
        %v239 = vld [vmem:[%s162 + $0xe8] sm:$0xff]
        %v240 = vld [vmem:[%s162 + $0xf0] sm:$0xff]
        %v241 = vld [vmem:[%s162 + $0xf8] sm:$0xff]
        %v242 = vld [vmem:[%s162 + $0x100] sm:$0xff]
        %v243 = vld [vmem:[%s162 + $0x108] sm:$0xff]
        %v244 = vld [vmem:[%s162 + $0x110] sm:$0xff]
        %v245 = vld [vmem:[%s162 + $0x118] sm:$0xff]
        %v246 = vld [vmem:[%s162 + $0x120] sm:$0xff]
        %v247 = vld [vmem:[%s162 + $0x128] sm:$0xff]
        %v248 = vld [vmem:[%s162 + $0x130] sm:$0xff]
        %v249 = vld [vmem:[%s162 + $0x138] sm:$0xff]
        %v250 = vld [vmem:[%s162 + $0x140] sm:$0xff]
        %v251 = vld [vmem:[%s162 + $0x148] sm:$0xff]
        %v252 = vld [vmem:[%s162 + $0x150] sm:$0xff]
        %v253 = vld [vmem:[%s162 + $0x158] sm:$0xff]
        %v254 = vld [vmem:[%s162 + $0x160] sm:$0xff]
        %v255 = vld [vmem:[%s162 + $0x168] sm:$0xff]
        %v256 = vld [vmem:[%s162 + $0x170] sm:$0xff]
        %v257 = vld [vmem:[%s162 + $0x178] sm:$0xff]
        %v258 = vld [vmem:[%s162 + $0x180] sm:$0xff]
        %v259 = vld [vmem:[%s162 + $0x188] sm:$0xff]
        %v260 = vld [vmem:[%s162 + $0x190] sm:$0xff]
        %v261 = vld [vmem:[%s162 + $0x198] sm:$0xff]
        %v262 = vld [vmem:[%s162 + $0x1a0] sm:$0xff]
        %v263 = vld [vmem:[%s162 + $0x1a8] sm:$0xff]
        %v264 = vld [vmem:[%s162 + $0x1b0] sm:$0xff]
        %v265 = vld [vmem:[%s162 + $0x1b8] sm:$0xff]
        %v266 = vld [vmem:[%s162 + $0x1c0] sm:$0xff]
        %v267 = vld [vmem:[%s162 + $0x1c8] sm:$0xff]
        %v268 = vld [vmem:[%s162 + $0x1d0] sm:$0xff]
        %v269 = vld [vmem:[%s162 + $0x1d8] sm:$0xff]
        %v270 = vld [vmem:[%s162 + $0x1e0] sm:$0xff]
        %v271 = vld [vmem:[%s162 + $0x1e8] sm:$0xff]
        %v272 = vld [vmem:[%s162 + $0x1f0] sm:$0xff]
        %v273 = vld [vmem:[%s162 + $0x1f8] sm:$0xff]
        %274 = vmatprep.subr.mxu0 %v211
        %275 = vmatpush1.msra.mxu0 %v210
        %276 = vmatprep.subr.mxu0 %v213
        %277 = vmatpush1.msra.mxu0 %v212
        %278 = vmatprep.subr.mxu0 %v215
        %279 = vmatpush1.msra.mxu0 %v214
        %280 = vmatprep.subr.mxu0 %v217
        %281 = vmatpush1.msra.mxu0 %v216
        %282 = vmatprep.subr.mxu0 %v219
        %283 = vmatpush1.msra.mxu0 %v218
        %284 = vmatprep.subr.mxu0 %v221
        %285 = vmatpush1.msra.mxu0 %v220
        %286 = vmatprep.subr.mxu0 %v223
        %287 = vmatpush1.msra.mxu0 %v222
        %288 = vmatprep.subr.mxu0 %v225
        %289 = vmatpush1.msra.mxu0 %v224
        %290 = vmatprep.subr.mxu0 %v227
        %291 = vmatpush1.msra.mxu0 %v226
        %292 = vmatprep.subr.mxu0 %v229
        %293 = vmatpush1.msra.mxu0 %v228
        %294 = vmatprep.subr.mxu0 %v231
        %295 = vmatpush1.msra.mxu0 %v230
        %296 = vmatprep.subr.mxu0 %v233
        %297 = vmatpush1.msra.mxu0 %v232
        %298 = vmatprep.subr.mxu0 %v235
        %299 = vmatpush1.msra.mxu0 %v234
        %300 = vmatprep.subr.mxu0 %v237
        %301 = vmatpush1.msra.mxu0 %v236
        %302 = vmatprep.subr.mxu0 %v239
        %303 = vmatpush1.msra.mxu0 %v238
        %304 = vmatprep.subr.mxu0 %v241
        %305 = vmatpush1.msra.mxu0 %v240
        %306 = vmatprep.subr.mxu0 %v243
        %307 = vmatpush1.msra.mxu0 %v242
        %308 = vmatprep.subr.mxu0 %v245
        %309 = vmatpush1.msra.mxu0 %v244
        %310 = vmatprep.subr.mxu0 %v247
        %311 = vmatpush1.msra.mxu0 %v246
        %312 = vmatprep.subr.mxu0 %v249
        %313 = vmatpush1.msra.mxu0 %v248
        %314 = vmatprep.subr.mxu0 %v251
        %315 = vmatpush1.msra.mxu0 %v250
        %316 = vmatprep.subr.mxu0 %v253
        %317 = vmatpush1.msra.mxu0 %v252
        %318 = vmatprep.subr.mxu0 %v255
        %319 = vmatpush1.msra.mxu0 %v254
        %320 = vmatprep.subr.mxu0 %v257
        %321 = vmatpush1.msra.mxu0 %v256
        %322 = vmatprep.subr.mxu0 %v259
        %323 = vmatpush1.msra.mxu0 %v258
        %324 = vmatprep.subr.mxu0 %v261
        %325 = vmatpush1.msra.mxu0 %v260
        %326 = vmatprep.subr.mxu0 %v263
        %327 = vmatpush1.msra.mxu0 %v262
        %328 = vmatprep.subr.mxu0 %v265
        %329 = vmatpush1.msra.mxu0 %v264
        %330 = vmatprep.subr.mxu0 %v267
        %331 = vmatpush1.msra.mxu0 %v266
        %332 = vmatprep.subr.mxu0 %v269
        %333 = vmatpush1.msra.mxu0 %v268
        %334 = vmatprep.subr.mxu0 %v271
        %335 = vmatpush1.msra.mxu0 %v270
        %336 = vmatprep.subr.mxu0 %v273
        %337 = vmatpush1.msra.mxu0 %v272
        %338 = vmatprep.mubr.f32.mxu0 %v209
        %339 = vmatmul.mubr.f32.gmra.mrb[0].mxu0 %v208
        %v340 = vpop.f32.mrb[0].mxu0
        %v341 = vadd.f32 0.0, %v340
        %v342 = vpop.f32.mrb[0].mxu0
        %v343 = vadd.f32 0.0, %v342
        %344 = vdwg.mxu0
        %345 = vst [vmem:[%s206] sm:$0xff] %v341
        %346 = vst [vmem:[%s206 + $0x8] sm:$0xff] %v343
        %s347 = smul.u32 2, %s21
        %p348 = scmp.lt.s32.totalorder %s20, 0
        %s349 = scalar_select %p348, %s20, 0
        %p350 = scmp.lt.s32.totalorder %s347, 7
        %s351 = scalar_select %p350, %s347, 7
        %s352 = smul.addr %s349, 8
        %s353 = sadd.s32 %s351, %s352
        %s354 = smul.addr %s353, 8
        %s355 = scalar_lea.vmem %s2, %s354
        // Predicated region
        $region33: #{_nearest_upsample_2d.1} parent=27 // pred_check
          %p356 = pneg %p100
        $region34: #{_nearest_upsample_2d.1} parent=27 // pred_check_branch
          %358 = sbr.rel (%p356) target = $region36
        $region35: #{_nearest_upsample_2d.1} parent=27 // pred_region
          %s359 = smul.u32 2, %s21
        $region36: #{_nearest_upsample_2d.1} parent=27 // pred_fallthru
          _
      $region28: #{_nearest_upsample_2d.1} parent=5 // pred_fallthru
        _
      %p360 = scmp.le.s32.totalorder 2, %s11
      // Predicated region
      $region37: #{_nearest_upsample_2d.1} parent=5 // pred_check
        %p361 = pneg %p360
      $region38: #{_nearest_upsample_2d.1} parent=5 // pred_check_branch
        %363 = sbr.rel (%p361) target = $region40
      $region39: #{_nearest_upsample_2d.1} parent=5 // pred_region
        %s364 = ssub.s32 %s11, 2
        // Predicated region
        $region41: #{_nearest_upsample_2d.1} parent=39 // pred_check
          %p365 = pneg %p106
        $region42: #{_nearest_upsample_2d.1} parent=39 // pred_check_branch
          %367 = sbr.rel (%p365) target = $region44
        $region43: #{_nearest_upsample_2d.1} parent=39 // pred_region
          %s368 = smul.u32 2, %s23
          %p369 = scmp.lt.s32.totalorder %s22, 0
          %s370 = scalar_select %p369, %s22, 0
          %p371 = scmp.lt.s32.totalorder %s368, 7
          %s372 = scalar_select %p371, %s368, 7
          %s373 = smul.addr %s370, 8
          %s374 = sadd.s32 %s372, %s373
          %s375 = smul.addr %s374, 8
          %s376 = scalar_lea.vmem %s2, %s375
        $region44: #{_nearest_upsample_2d.1} parent=39 // pred_fallthru
          _
      $region40: #{_nearest_upsample_2d.1} parent=5 // pred_fallthru
        _
    $region6: #{_nearest_upsample_2d.1} parent=1 // loop_footer
      %s15 = sadd.s32 1, %s11
    $region7: #{_nearest_upsample_2d.1} parent=1 // loop_footer_branch
      %10 = sbr.rel target = $region3
    $region8: #{_nearest_upsample_2d.1} parent=1 // loop_exit
      _
    %377 = vsyncpa [#allocation3], 1
    %s378 = scalar_lea.sflag [#allocation3], 1
    %379 = vsyncpa %s378, 1

</llo_original>
